<compile_context>
chip_gen: v5e
topology: v5e:2x2
jax: 0.10.0
libtpu: 0.0.40
codegen_flags: <defaults>
</compile_context>

<pallas_src>
import functools

import jax
import jax.numpy as jnp
from jax.experimental import pallas as pl
from jax.experimental.pallas import tpu as pltpu


def _round_up(x, m):
    return (x + m - 1) // m * m


def _has_bf16_vpu():
    """True on chips whose VPU handles bf16 natively (v6e / v7x); False on <= v5."""
    try:
        kind = jax.devices()[0].device_kind.lower()
    except Exception:
        return False
    return not any(v in kind for v in ("v2", "v3", "v4", "v5"))


def _mlp_kernel(x_ref, w1_ref, b1_ref, w2_ref, b2_ref, w3_ref, b3_ref,
                w4_ref, b4_ref, o_ref, *, act_dtype):
    """Fused (Linear -> ReLU) x3 -> Linear.

    MXU operands use the weights' dtype (bf16 fast path or f32); accumulation is
    always f32; bias add + ReLU run in `act_dtype` (bf16 on v6e/v7x, f32 on v5e).
    """
    cdt = w1_ref.dtype
    h = x_ref[...].astype(cdt)   # in-kernel cast: x arrives as f32

    for w_ref, b_ref in ((w1_ref, b1_ref), (w2_ref, b2_ref), (w3_ref, b3_ref)):
        y = jnp.dot(h, w_ref[...], preferred_element_type=jnp.float32)
        y = y.astype(act_dtype) + b_ref[...].astype(act_dtype)
        h = jnp.maximum(y, 0).astype(cdt)

    out = jnp.dot(h, w4_ref[...], preferred_element_type=jnp.float32)
    out = out + b4_ref[...].astype(jnp.float32)   # final layer epilogue in f32
    o_ref[...] = out.astype(o_ref.dtype)


def prepare_params(params, *, use_bf16=True, lane_pad=128):
    """Pad hidden width to 128 lanes and cast weights to the MXU dtype.

    Call ONCE; the result is reused by every robot_nn_forward call so no per-call
    padding / casting ops remain in the forward path.
    """
    mxu_dtype = jnp.bfloat16 if use_bf16 else jnp.float32
    num_inputs, hidden = params["w1"].shape
    num_outputs = params["w4"].shape[1]
    hidden_p = _round_up(hidden, lane_pad)

    def pad_w(w, rows, cols):
        w = jnp.pad(w, ((0, rows - w.shape[0]), (0, cols - w.shape[1])))
        return w.astype(mxu_dtype)

    def pad_b(b, cols):
        return jnp.pad(b, ((0, 0), (0, cols - b.shape[1]))).astype(jnp.float32)

    return {
        "w1": pad_w(params["w1"], num_inputs, hidden_p),
        "b1": pad_b(params["b1"], hidden_p),
        "w2": pad_w(params["w2"], hidden_p, hidden_p),
        "b2": pad_b(params["b2"], hidden_p),
        "w3": pad_w(params["w3"], hidden_p, hidden_p),
        "b3": pad_b(params["b3"], hidden_p),
        # w4/b4 keep the true num_outputs width -> lane-exact output block,
        # no padded writeback and no post-call column slice.
        "w4": pad_w(params["w4"], hidden_p, num_outputs),
        "b4": params["b4"].astype(jnp.float32),
    }


def robot_nn_forward(x, prepared, *, batch_tile=512, act_in_bf16=None):
    """Pallas forward of RobotNN.

    x:        [B, num_inputs] float32
    prepared: output of prepare_params(params)
    Returns:  [B, num_outputs] float32
    """
    B, num_inputs = x.shape
    num_outputs = prepared["w4"].shape[1]

    mxu_is_bf16 = prepared["w1"].dtype == jnp.bfloat16
    if act_in_bf16 is None:
        act_in_bf16 = mxu_is_bf16 and _has_bf16_vpu()
    act_dtype = jnp.bfloat16 if (act_in_bf16 and mxu_is_bf16) else jnp.float32

    # Batch tiling: single grid step whenever the batch fits one tile; otherwise
    # split into the minimum number of equal-ish tiles (multiple of 8) so padding
    # stays small. No forced splits (grid is a serial loop on 1-TC chips).
    tb_cap = max(8, batch_tile - batch_tile % 8)
    if B <= tb_cap:
        n_steps = 1
        tb = _round_up(B, 8)
    else:
        n_steps = pl.cdiv(B, tb_cap)
        tb = _round_up(pl.cdiv(B, n_steps), 8)
    B_pad = tb * n_steps

    x_in = x if B_pad == B else jnp.pad(x, ((0, B_pad - B), (0, 0)))

    def full_spec(arr):
        # Constant index_map -> tensor stays resident in VMEM across grid steps.
        return pl.BlockSpec(arr.shape, lambda i: (0, 0))

    kernel = functools.partial(_mlp_kernel, act_dtype=act_dtype)

    out = pl.pallas_call(
        kernel,
        out_shape=jax.ShapeDtypeStruct((B_pad, num_outputs), jnp.float32),
        grid_spec=pltpu.PrefetchScalarGridSpec(
            num_scalar_prefetch=0,
            grid=(n_steps,),
            in_specs=[
                pl.BlockSpec((tb, num_inputs), lambda i: (i, 0)),   # x tile (f32)
                full_spec(prepared["w1"]), full_spec(prepared["b1"]),
                full_spec(prepared["w2"]), full_spec(prepared["b2"]),
                full_spec(prepared["w3"]), full_spec(prepared["b3"]),
                full_spec(prepared["w4"]), full_spec(prepared["b4"]),
            ],
            out_specs=pl.BlockSpec((tb, num_outputs), lambda i: (i, 0)),
        ),
        compiler_params=pltpu.CompilerParams(
            dimension_semantics=("parallel",)),
    )(x_in, prepared["w1"], prepared["b1"], prepared["w2"], prepared["b2"],
      prepared["w3"], prepared["b3"], prepared["w4"], prepared["b4"])

    return out if B_pad == B else out[:B]


def init_params(key, num_inputs, num_outputs, hidden=64):
    """Deterministic init mimicking nn.Linear (uniform(-1/sqrt(fan_in), +))."""
    dims = [(num_inputs, hidden), (hidden, hidden), (hidden, hidden),
            (hidden, num_outputs)]
    params = {}
    for idx, (fan_in, fan_out) in enumerate(dims, start=1):
        key, kw, kb = jax.random.split(key, 3)
        bound = 1.0 / jnp.sqrt(float(fan_in))
        params[f"w{idx}"] = jax.random.uniform(
            kw, (fan_in, fan_out), jnp.float32, -bound, bound)
        params[f"b{idx}"] = jax.random.uniform(
            kb, (1, fan_out), jnp.float32, -bound, bound)
    return params


def robot_nn_reference(x, params):
    """Pure-JAX f32 reference for correctness checking."""
    h = jnp.maximum(x @ params["w1"] + params["b1"], 0.0)
    h = jnp.maximum(h @ params["w2"] + params["b2"], 0.0)
    h = jnp.maximum(h @ params["w3"] + params["b3"], 0.0)
    return h @ params["w4"] + params["b4"]


if __name__ == "__main__":
    key = jax.random.PRNGKey(0)
    num_inputs, num_outputs, hidden = 32, 8, 64
    batch = 8

    key, kx, kp = jax.random.split(key, 3)
    x = jax.random.normal(kx, (batch, num_inputs), jnp.float32)
    params = init_params(kp, num_inputs, num_outputs, hidden)
    ref = robot_nn_reference(x, params)

    # f32 MXU-operand path: exact vs reference.
    prep_f32 = prepare_params(params, use_bf16=False)
    out_f32 = jax.block_until_ready(robot_nn_forward(x, prep_f32))
    assert out_f32.shape == (batch, num_outputs)
    assert jnp.allclose(out_f32, ref, atol=1e-5, rtol=1e-5), "f32 mismatch"

    # bf16 MXU fast path (params prepared once, reused across calls).
    prep_bf16 = prepare_params(params, use_bf16=True)
    out_bf16 = jax.block_until_ready(robot_nn_forward(x, prep_bf16))
    assert out_bf16.shape == (batch, num_outputs)
    assert jnp.allclose(out_bf16, ref, atol=5e-2, rtol=5e-2), "bf16 mismatch"

    # Ragged batch + multi-step grid (exercises batch padding / tiling path).
    key, kx2 = jax.random.split(key)
    x2 = jax.random.normal(kx2, (40, num_inputs), jnp.float32)
    ref2 = robot_nn_reference(x2, params)
    out2 = jax.block_until_ready(robot_nn_forward(x2, prep_bf16, batch_tile=16))
    assert out2.shape == (40, num_outputs)
    assert jnp.allclose(out2, ref2, atol=5e-2, rtol=5e-2), "tiled mismatch"

    print("KERNEL_OK")
</pallas_src>

<mosaic_0001>
module attributes {stable_mosaic.version = 11 : i64} {
  func.func @_mlp_kernel(%arg0: i32, %arg1: memref<8x32xf32, #tpu.memory_space<vmem>>, %arg2: memref<32x128xf32, #tpu.memory_space<vmem>>, %arg3: memref<1x128xf32, #tpu.memory_space<vmem>>, %arg4: memref<128x128xf32, #tpu.memory_space<vmem>>, %arg5: memref<1x128xf32, #tpu.memory_space<vmem>>, %arg6: memref<128x128xf32, #tpu.memory_space<vmem>>, %arg7: memref<1x128xf32, #tpu.memory_space<vmem>>, %arg8: memref<128x8xf32, #tpu.memory_space<vmem>>, %arg9: memref<1x8xf32, #tpu.memory_space<vmem>>, %arg10: memref<8x8xf32, #tpu.memory_space<vmem>>) attributes {dimension_semantics = [#tpu.dimension_semantics<parallel>], iteration_bounds = array<i64: 1>, scalar_prefetch = 0 : i64, scratch_operands = 0 : i64, tpu.core_type = #tpu.core_type<tc>, window_params = [{transform_indices = @transform_0, window_bounds = array<i64: 8, 32>}, {pipeline_mode = #tpu.pipeline_mode<synchronous>, transform_indices = @transform_1, window_bounds = array<i64: 32, 128>}, {pipeline_mode = #tpu.pipeline_mode<synchronous>, transform_indices = @transform_2, window_bounds = array<i64: 1, 128>}, {pipeline_mode = #tpu.pipeline_mode<synchronous>, transform_indices = @transform_3, window_bounds = array<i64: 128, 128>}, {pipeline_mode = #tpu.pipeline_mode<synchronous>, transform_indices = @transform_4, window_bounds = array<i64: 1, 128>}, {pipeline_mode = #tpu.pipeline_mode<synchronous>, transform_indices = @transform_5, window_bounds = array<i64: 128, 128>}, {pipeline_mode = #tpu.pipeline_mode<synchronous>, transform_indices = @transform_6, window_bounds = array<i64: 1, 128>}, {pipeline_mode = #tpu.pipeline_mode<synchronous>, transform_indices = @transform_7, window_bounds = array<i64: 128, 8>}, {pipeline_mode = #tpu.pipeline_mode<synchronous>, transform_indices = @transform_8, window_bounds = array<i64: 1, 8>}, {transform_indices = @transform_9, window_bounds = array<i64: 8, 8>}]} {
    %c0 = arith.constant 0 : index
    %c0_0 = arith.constant 0 : index
    %0 = vector.load %arg1[%c0, %c0_0] : memref<8x32xf32, #tpu.memory_space<vmem>>, vector<8x32xf32>
    %c0_1 = arith.constant 0 : index
    %c0_2 = arith.constant 0 : index
    %1 = vector.load %arg2[%c0_1, %c0_2] : memref<32x128xf32, #tpu.memory_space<vmem>>, vector<32x128xf32>
    %cst = arith.constant dense<0.000000e+00> : vector<8x128xf32>
    %2 = tpu.matmul %0, %1, %cst {dimension_numbers = #tpu.dot_dimension_numbers<[1], [0], [0], [1], [0, 0, 1, 1], [], []>} : vector<8x32xf32>, vector<32x128xf32>, vector<8x128xf32> -> vector<8x128xf32>
    %c0_3 = arith.constant 0 : index
    %c0_4 = arith.constant 0 : index
    %3 = vector.load %arg3[%c0_3, %c0_4] : memref<1x128xf32, #tpu.memory_space<vmem>>, vector<1x128xf32>
    %4 = vector.broadcast %3 : vector<1x128xf32> to vector<8x128xf32>
    %5 = arith.addf %2, %4 : vector<8x128xf32>
    %cst_5 = arith.constant 0.000000e+00 : f32
    %6 = vector.broadcast %cst_5 : f32 to vector<8x128xf32>
    %7 = arith.maximumf %5, %6 : vector<8x128xf32>
    %c0_6 = arith.constant 0 : index
    %c0_7 = arith.constant 0 : index
    %8 = vector.load %arg4[%c0_6, %c0_7] : memref<128x128xf32, #tpu.memory_space<vmem>>, vector<128x128xf32>
    %cst_8 = arith.constant dense<0.000000e+00> : vector<8x128xf32>
    %9 = tpu.matmul %7, %8, %cst_8 {dimension_numbers = #tpu.dot_dimension_numbers<[1], [0], [0], [1], [0, 0, 1, 1], [], []>} : vector<8x128xf32>, vector<128x128xf32>, vector<8x128xf32> -> vector<8x128xf32>
    %c0_9 = arith.constant 0 : index
    %c0_10 = arith.constant 0 : index
    %10 = vector.load %arg5[%c0_9, %c0_10] : memref<1x128xf32, #tpu.memory_space<vmem>>, vector<1x128xf32>
    %11 = vector.broadcast %10 : vector<1x128xf32> to vector<8x128xf32>
    %12 = arith.addf %9, %11 : vector<8x128xf32>
    %cst_11 = arith.constant 0.000000e+00 : f32
    %13 = vector.broadcast %cst_11 : f32 to vector<8x128xf32>
    %14 = arith.maximumf %12, %13 : vector<8x128xf32>
    %c0_12 = arith.constant 0 : index
    %c0_13 = arith.constant 0 : index
    %15 = vector.load %arg6[%c0_12, %c0_13] : memref<128x128xf32, #tpu.memory_space<vmem>>, vector<128x128xf32>
    %cst_14 = arith.constant dense<0.000000e+00> : vector<8x128xf32>
    %16 = tpu.matmul %14, %15, %cst_14 {dimension_numbers = #tpu.dot_dimension_numbers<[1], [0], [0], [1], [0, 0, 1, 1], [], []>} : vector<8x128xf32>, vector<128x128xf32>, vector<8x128xf32> -> vector<8x128xf32>
    %c0_15 = arith.constant 0 : index
    %c0_16 = arith.constant 0 : index
    %17 = vector.load %arg7[%c0_15, %c0_16] : memref<1x128xf32, #tpu.memory_space<vmem>>, vector<1x128xf32>
    %18 = vector.broadcast %17 : vector<1x128xf32> to vector<8x128xf32>
    %19 = arith.addf %16, %18 : vector<8x128xf32>
    %cst_17 = arith.constant 0.000000e+00 : f32
    %20 = vector.broadcast %cst_17 : f32 to vector<8x128xf32>
    %21 = arith.maximumf %19, %20 : vector<8x128xf32>
    %c0_18 = arith.constant 0 : index
    %c0_19 = arith.constant 0 : index
    %22 = vector.load %arg8[%c0_18, %c0_19] : memref<128x8xf32, #tpu.memory_space<vmem>>, vector<128x8xf32>
    %cst_20 = arith.constant dense<0.000000e+00> : vector<8x8xf32>
    %23 = tpu.matmul %21, %22, %cst_20 {dimension_numbers = #tpu.dot_dimension_numbers<[1], [0], [0], [1], [0, 0, 1, 1], [], []>} : vector<8x128xf32>, vector<128x8xf32>, vector<8x8xf32> -> vector<8x8xf32>
    %c0_21 = arith.constant 0 : index
    %c0_22 = arith.constant 0 : index
    %24 = vector.load %arg9[%c0_21, %c0_22] : memref<1x8xf32, #tpu.memory_space<vmem>>, vector<1x8xf32>
    %25 = vector.broadcast %24 : vector<1x8xf32> to vector<8x8xf32>
    %26 = arith.addf %23, %25 : vector<8x8xf32>
    %c0_23 = arith.constant 0 : index
    %c0_24 = arith.constant 0 : index
    %27 = vector.load %arg10[%c0_23, %c0_24] : memref<8x8xf32, #tpu.memory_space<vmem>>, vector<8x8xf32>
    tpu.vector_store %arg10[%c0_23, %c0_24], %26 {strides = array<i32>} : memref<8x8xf32, #tpu.memory_space<vmem>>, vector<8x8xf32>,
    return
  }
  func.func @transform_0(%arg0: i32) -> (i32, i32) {
    %c0_i32 = arith.constant 0 : i32
    %c0_i32_0 = arith.constant 0 : i32
    return %arg0, %c0_i32 : i32, i32
  }
  func.func @transform_1(%arg0: i32) -> (i32, i32) {
    %c0_i32 = arith.constant 0 : i32
    %c0_i32_0 = arith.constant 0 : i32
    %c0_i32_1 = arith.constant 0 : i32
    return %c0_i32, %c0_i32_0 : i32, i32
  }
  func.func @transform_2(%arg0: i32) -> (i32, i32) {
    %c0_i32 = arith.constant 0 : i32
    %c0_i32_0 = arith.constant 0 : i32
    %c0_i32_1 = arith.constant 0 : i32
    return %c0_i32, %c0_i32_0 : i32, i32
  }
  func.func @transform_3(%arg0: i32) -> (i32, i32) {
    %c0_i32 = arith.constant 0 : i32
    %c0_i32_0 = arith.constant 0 : i32
    %c0_i32_1 = arith.constant 0 : i32
    return %c0_i32, %c0_i32_0 : i32, i32
  }
  func.func @transform_4(%arg0: i32) -> (i32, i32) {
    %c0_i32 = arith.constant 0 : i32
    %c0_i32_0 = arith.constant 0 : i32
    %c0_i32_1 = arith.constant 0 : i32
    return %c0_i32, %c0_i32_0 : i32, i32
  }
  func.func @transform_5(%arg0: i32) -> (i32, i32) {
    %c0_i32 = arith.constant 0 : i32
    %c0_i32_0 = arith.constant 0 : i32
    %c0_i32_1 = arith.constant 0 : i32
    return %c0_i32, %c0_i32_0 : i32, i32
  }
  func.func @transform_6(%arg0: i32) -> (i32, i32) {
    %c0_i32 = arith.constant 0 : i32
    %c0_i32_0 = arith.constant 0 : i32
    %c0_i32_1 = arith.constant 0 : i32
    return %c0_i32, %c0_i32_0 : i32, i32
  }
  func.func @transform_7(%arg0: i32) -> (i32, i32) {
    %c0_i32 = arith.constant 0 : i32
    %c0_i32_0 = arith.constant 0 : i32
    %c0_i32_1 = arith.constant 0 : i32
    return %c0_i32, %c0_i32_0 : i32, i32
  }
  func.func @transform_8(%arg0: i32) -> (i32, i32) {
    %c0_i32 = arith.constant 0 : i32
    %c0_i32_0 = arith.constant 0 : i32
    %c0_i32_1 = arith.constant 0 : i32
    return %c0_i32, %c0_i32_0 : i32, i32
  }
  func.func @transform_9(%arg0: i32) -> (i32, i32) {
    %c0_i32 = arith.constant 0 : i32
    %c0_i32_0 = arith.constant 0 : i32
    return %arg0, %c0_i32 : i32, i32
  }
}

</mosaic_0001>

<llo_original>
// kernel: tpu_custom_call.1
$region0: #{tpu_custom_call.1}
  #allocation0 [shape = 'u32[]', space=smem, size = 0x4, offset = 0x4, fixed_abs, tag = 'smem constant byte address 0x4 - core index']
  #allocation1 [shape = 'u32[72,128]{1,0:T(1,128)}', space=vmem, size = 0x9000, scoped, tag = 'internal scratch']
  %s0 = inlined_call_operand.vmem [shape: f32[8,32], index: 0, kind: input, shape index: {}]
  %s1 = inlined_call_operand.hbm [shape: f32[32,128], index: 1, kind: input, shape index: {}]
  %s2 = inlined_call_operand.vmem [shape: f32[1,128], index: 2, kind: input, shape index: {}]
  %s3 = inlined_call_operand.vmem [shape: f32[128,128], index: 3, kind: input, shape index: {}]
  %s4 = inlined_call_operand.vmem [shape: f32[1,128], index: 4, kind: input, shape index: {}]
  %s5 = inlined_call_operand.hbm [shape: f32[128,128], index: 5, kind: input, shape index: {}]
  %s6 = inlined_call_operand.vmem [shape: f32[1,128], index: 6, kind: input, shape index: {}]
  %s7 = inlined_call_operand.vmem [shape: f32[128,8], index: 7, kind: input, shape index: {}]
  %s8 = inlined_call_operand.vmem [shape: f32[1,8], index: 8, kind: input, shape index: {}]
  %s9 = inlined_call_operand.hbm [shape: f32[8,8], index: 9, kind: output, shape index: {}]
  %s10 = sld [smem:[#allocation0]]
  $region54: #{tpu_custom_call.1} parent=0
    _
  %s12 = ssub.s32 1, %s10
  %s13 = scalar_select 0, %s12, %s10
  $region1: #{tpu_custom_call.1} parent=0
    #allocation2 [shape = 'u8[16384]{0}', space=vmem, size = 0x4000, scoped, tag = 'input window, operand 1, single buffered']
    #allocation3 [shape = 's32[1]{0}', space=sflag, size = 0x4, scoped, tag = 'scoped memory for tpu_custom_call.1']
    #allocation4 [shape = 's32[1]{0}', space=sflag, size = 0x4, scoped, tag = 'scoped memory for tpu_custom_call.1']
    #allocation5 [shape = 'u8[65536]{0}', space=vmem, size = 0x10000, scoped, tag = 'input window, operand 5, single buffered']
    #allocation6 [shape = 's32[1]{0}', space=sflag, size = 0x4, scoped, tag = 'scoped memory for tpu_custom_call.1']
    #allocation7 [shape = 'u8[4096]{0}', space=vmem, size = 0x1000, scoped, tag = 'output window, operand 0, single buffered']
    %14 = vsyncpa [#allocation3], 0
    %15 = vsyncpa [#allocation6], 0
    %16 = vsyncpa [#allocation4], 0
    // Predicated region
    $region2: #{tpu_custom_call.1} parent=1 // pred_check
      _
    $region3: #{tpu_custom_call.1} parent=1 // pred_check_branch
      %18 = sbr.rel (0) target = $region5
    $region4: #{tpu_custom_call.1} parent=1 // pred_region
      _
    $region5: #{tpu_custom_call.1} parent=1 // pred_fallthru
      _
    // Predicated region
    $region6: #{tpu_custom_call.1} parent=1 // pred_check
      _
    $region7: #{tpu_custom_call.1} parent=1 // pred_check_branch
      %20 = sbr.rel (0) target = $region9
    $region8: #{tpu_custom_call.1} parent=1 // pred_region
      %22 = vsyncadd [#allocation3], 0
      %s23 = sshll.u32 %s1, 4
      %s24 = int_to_ptr.hbm [resolvable:$true] %s23
      %s25 = sshll.u32 [#allocation2], 4
      %s26 = int_to_ptr.vmem [resolvable:$true] %s25
      %31 = dma.hbm_to_vmem [thread:$0]  %s24, 512, %s26, [#allocation3], 128, 128, 8
    $region9: #{tpu_custom_call.1} parent=1 // pred_fallthru
      _
    // Predicated region
    $region10: #{tpu_custom_call.1} parent=1 // pred_check
      _
    $region11: #{tpu_custom_call.1} parent=1 // pred_check_branch
      %33 = sbr.rel (0) target = $region13
    $region12: #{tpu_custom_call.1} parent=1 // pred_region
      _
    $region13: #{tpu_custom_call.1} parent=1 // pred_fallthru
      _
    // Predicated region
    $region14: #{tpu_custom_call.1} parent=1 // pred_check
      _
    $region15: #{tpu_custom_call.1} parent=1 // pred_check_branch
      %35 = sbr.rel (0) target = $region17
    $region16: #{tpu_custom_call.1} parent=1 // pred_region
      _
    $region17: #{tpu_custom_call.1} parent=1 // pred_fallthru
      _
    // Predicated region
    $region18: #{tpu_custom_call.1} parent=1 // pred_check
      _
    $region19: #{tpu_custom_call.1} parent=1 // pred_check_branch
      %37 = sbr.rel (0) target = $region21
    $region20: #{tpu_custom_call.1} parent=1 // pred_region
      _
    $region21: #{tpu_custom_call.1} parent=1 // pred_fallthru
      _
    // Predicated region
    $region22: #{tpu_custom_call.1} parent=1 // pred_check
      _
    $region23: #{tpu_custom_call.1} parent=1 // pred_check_branch
      %39 = sbr.rel (0) target = $region25
    $region24: #{tpu_custom_call.1} parent=1 // pred_region
      %41 = vsyncadd [#allocation6], 0
      %s42 = sshll.u32 %s5, 4
      %s43 = int_to_ptr.hbm [resolvable:$true] %s42
      %s44 = sshll.u32 [#allocation5], 4
      %s45 = int_to_ptr.vmem [resolvable:$true] %s44
      %50 = dma.hbm_to_vmem [thread:$0]  %s43, 2048, %s45, [#allocation6], 128, 128, 8
    $region25: #{tpu_custom_call.1} parent=1 // pred_fallthru
      _
    // Predicated region
    $region26: #{tpu_custom_call.1} parent=1 // pred_check
      _
    $region27: #{tpu_custom_call.1} parent=1 // pred_check_branch
      %52 = sbr.rel (0) target = $region29
    $region28: #{tpu_custom_call.1} parent=1 // pred_region
      _
    $region29: #{tpu_custom_call.1} parent=1 // pred_fallthru
      _
    // Predicated region
    $region30: #{tpu_custom_call.1} parent=1 // pred_check
      _
    $region31: #{tpu_custom_call.1} parent=1 // pred_check_branch
      %54 = sbr.rel (0) target = $region33
    $region32: #{tpu_custom_call.1} parent=1 // pred_region
      _
    $region33: #{tpu_custom_call.1} parent=1 // pred_fallthru
      _
    // Predicated region
    $region34: #{tpu_custom_call.1} parent=1 // pred_check
      _
    $region35: #{tpu_custom_call.1} parent=1 // pred_check_branch
      %56 = sbr.rel (0) target = $region37
    $region36: #{tpu_custom_call.1} parent=1 // pred_region
      _
    $region37: #{tpu_custom_call.1} parent=1 // pred_fallthru
      _
    // Predicated region
    $region38: #{tpu_custom_call.1} parent=1 // pred_check
      _
    $region39: #{tpu_custom_call.1} parent=1 // pred_check_branch
      %58 = sbr.rel (0) target = $region41
    $region40: #{tpu_custom_call.1} parent=1 // pred_region
      %60 = dma.done [#allocation3], 512
    $region41: #{tpu_custom_call.1} parent=1 // pred_fallthru
      _
    // Predicated region
    $region42: #{tpu_custom_call.1} parent=1 // pred_check
      _
    $region43: #{tpu_custom_call.1} parent=1 // pred_check_branch
      %62 = sbr.rel (0) target = $region45
    $region44: #{tpu_custom_call.1} parent=1 // pred_region
      %64 = dma.done [#allocation6], 2048
    $region45: #{tpu_custom_call.1} parent=1 // pred_fallthru
      _
    %v65 = vld [vmem:[%s0] sm:$0xff]
    %v66 = vld [vmem:[#allocation2] sm:$0xff]
    %v67 = vld [vmem:[#allocation2 + $0x8] sm:$0xff]
    %v68 = vld [vmem:[#allocation2 + $0x10] sm:$0xff]
    %v69 = vld [vmem:[#allocation2 + $0x18] sm:$0xff]
    %v70 = vld [vmem:[%s2] sm:$0x1]
    %v72 = vperm.slane %v70, 0
    %vm74 = vcmask 261120
    %v76 = vsel %vm74, %v65, 0
    %78 = vmatpush.msra.mxu0 0.0
    %79 = vmatpush.msra.mxu0 0.0
    %80 = vmatpush.msra.mxu0 0.0
    %81 = vmatpush.msra.mxu0 0.0
    %82 = vmatpush.msra.mxu0 0.0
    %83 = vmatpush.msra.mxu0 0.0
    %84 = vmatpush.msra.mxu0 0.0
    %85 = vmatpush.msra.mxu0 0.0
    %86 = vmatpush.msra.mxu0 0.0
    %87 = vmatpush.msra.mxu0 0.0
    %88 = vmatpush.msra.mxu0 0.0
    %89 = vmatpush.msra.mxu0 0.0
    %90 = vmatpush.msra.mxu0 %v69
    %91 = vmatpush.msra.mxu0 %v68
    %92 = vmatpush.msra.mxu0 %v67
    %93 = vmatpush.msra.mxu0 %v66
    %94 = vmatmul.f32.gmra.mxu0 %v76
    %v95 = vpop.f32.mrf.mxu0
    %v96 = vadd.f32 %v72, %v95
    %97 = vdwg.mxu0
    %v98 = vmax.f32 %v96, 0.0
    %v99 = vld [vmem:[%s3] sm:$0xff]
    %v100 = vld [vmem:[%s3 + $0x8] sm:$0xff]
    %v101 = vld [vmem:[%s3 + $0x10] sm:$0xff]
    %v102 = vld [vmem:[%s3 + $0x18] sm:$0xff]
    %v103 = vld [vmem:[%s3 + $0x20] sm:$0xff]
    %v104 = vld [vmem:[%s3 + $0x28] sm:$0xff]
    %v105 = vld [vmem:[%s3 + $0x30] sm:$0xff]
    %v106 = vld [vmem:[%s3 + $0x38] sm:$0xff]
    %v107 = vld [vmem:[%s3 + $0x40] sm:$0xff]
    %v108 = vld [vmem:[%s3 + $0x48] sm:$0xff]
    %v109 = vld [vmem:[%s3 + $0x50] sm:$0xff]
    %v110 = vld [vmem:[%s3 + $0x58] sm:$0xff]
    %v111 = vld [vmem:[%s3 + $0x60] sm:$0xff]
    %v112 = vld [vmem:[%s3 + $0x68] sm:$0xff]
    %v113 = vld [vmem:[%s3 + $0x70] sm:$0xff]
    %v114 = vld [vmem:[%s3 + $0x78] sm:$0xff]
    %v115 = vld [vmem:[%s4] sm:$0x1]
    %v117 = vperm.slane %v115, 0
    %119 = vmatpush.msra.mxu0 %v114
    %120 = vmatpush.msra.mxu0 %v113
    %121 = vmatpush.msra.mxu0 %v112
    %122 = vmatpush.msra.mxu0 %v111
    %123 = vmatpush.msra.mxu0 %v110
    %124 = vmatpush.msra.mxu0 %v109
    %125 = vmatpush.msra.mxu0 %v108
    %126 = vmatpush.msra.mxu0 %v107
    %127 = vmatpush.msra.mxu0 %v106
    %128 = vmatpush.msra.mxu0 %v105
    %129 = vmatpush.msra.mxu0 %v104
    %130 = vmatpush.msra.mxu0 %v103
    %131 = vmatpush.msra.mxu0 %v102
    %132 = vmatpush.msra.mxu0 %v101
    %133 = vmatpush.msra.mxu0 %v100
    %134 = vmatpush.msra.mxu0 %v99
    %135 = vmatmul.f32.gmra.mxu0 %v98
    %v136 = vpop.f32.mrf.mxu0
    %v137 = vadd.f32 %v117, %v136
    %138 = vdwg.mxu0
    %v139 = vmax.f32 %v137, 0.0
    %v140 = vld [vmem:[#allocation5] sm:$0xff]
    %v141 = vld [vmem:[#allocation5 + $0x8] sm:$0xff]
    %v142 = vld [vmem:[#allocation5 + $0x10] sm:$0xff]
    %v143 = vld [vmem:[#allocation5 + $0x18] sm:$0xff]
    %v144 = vld [vmem:[#allocation5 + $0x20] sm:$0xff]
    %v145 = vld [vmem:[#allocation5 + $0x28] sm:$0xff]
    %v146 = vld [vmem:[#allocation5 + $0x30] sm:$0xff]
    %v147 = vld [vmem:[#allocation5 + $0x38] sm:$0xff]
    %v148 = vld [vmem:[#allocation5 + $0x40] sm:$0xff]
    %v149 = vld [vmem:[#allocation5 + $0x48] sm:$0xff]
    %v150 = vld [vmem:[#allocation5 + $0x50] sm:$0xff]
    %v151 = vld [vmem:[#allocation5 + $0x58] sm:$0xff]
    %v152 = vld [vmem:[#allocation5 + $0x60] sm:$0xff]
    %v153 = vld [vmem:[#allocation5 + $0x68] sm:$0xff]
    %v154 = vld [vmem:[#allocation5 + $0x70] sm:$0xff]
    %v155 = vld [vmem:[#allocation5 + $0x78] sm:$0xff]
    %v156 = vld [vmem:[%s6] sm:$0x1]
    %v158 = vperm.slane %v156, 0
    %160 = vmatpush.msra.mxu0 %v155
    %161 = vmatpush.msra.mxu0 %v154
    %162 = vmatpush.msra.mxu0 %v153
    %163 = vmatpush.msra.mxu0 %v152
    %164 = vmatpush.msra.mxu0 %v151
    %165 = vmatpush.msra.mxu0 %v150
    %166 = vmatpush.msra.mxu0 %v149
    %167 = vmatpush.msra.mxu0 %v148
    %168 = vmatpush.msra.mxu0 %v147
    %169 = vmatpush.msra.mxu0 %v146
    %170 = vmatpush.msra.mxu0 %v145
    %171 = vmatpush.msra.mxu0 %v144
    %172 = vmatpush.msra.mxu0 %v143
    %173 = vmatpush.msra.mxu0 %v142
    %174 = vmatpush.msra.mxu0 %v141
    %175 = vmatpush.msra.mxu0 %v140
    %176 = vmatmul.f32.gmra.mxu0 %v139
    %v177 = vpop.f32.mrf.mxu0
    %v178 = vadd.f32 %v158, %v177
    %179 = vdwg.mxu0
    %v180 = vmax.f32 %v178, 0.0
    %v181 = vld [vmem:[%s7] sm:$0xff]
    %v182 = vld [vmem:[%s7 + $0x8] sm:$0xff]
    %v183 = vld [vmem:[%s7 + $0x10] sm:$0xff]
    %v184 = vld [vmem:[%s7 + $0x18] sm:$0xff]
    %v185 = vld [vmem:[%s7 + $0x20] sm:$0xff]
    %v186 = vld [vmem:[%s7 + $0x28] sm:$0xff]
    %v187 = vld [vmem:[%s7 + $0x30] sm:$0xff]
    %v188 = vld [vmem:[%s7 + $0x38] sm:$0xff]
    %v189 = vld [vmem:[%s7 + $0x40] sm:$0xff]
    %v190 = vld [vmem:[%s7 + $0x48] sm:$0xff]
    %v191 = vld [vmem:[%s7 + $0x50] sm:$0xff]
    %v192 = vld [vmem:[%s7 + $0x58] sm:$0xff]
    %v193 = vld [vmem:[%s7 + $0x60] sm:$0xff]
    %v194 = vld [vmem:[%s7 + $0x68] sm:$0xff]
    %v195 = vld [vmem:[%s7 + $0x70] sm:$0xff]
    %v196 = vld [vmem:[%s7 + $0x78] sm:$0xff]
    %v197 = vld [vmem:[%s8] sm:$0x1]
    %v199 = vperm.slane %v197, 0
    %201 = vmatpush.msra.mxu0 %v196
    %202 = vmatpush.msra.mxu0 %v195
    %203 = vmatpush.msra.mxu0 %v194
    %204 = vmatpush.msra.mxu0 %v193
    %205 = vmatpush.msra.mxu0 %v192
    %206 = vmatpush.msra.mxu0 %v191
    %207 = vmatpush.msra.mxu0 %v190
    %208 = vmatpush.msra.mxu0 %v189
    %209 = vmatpush.msra.mxu0 %v188
    %210 = vmatpush.msra.mxu0 %v187
    %211 = vmatpush.msra.mxu0 %v186
    %212 = vmatpush.msra.mxu0 %v185
    %213 = vmatpush.msra.mxu0 %v184
    %214 = vmatpush.msra.mxu0 %v183
    %215 = vmatpush.msra.mxu0 %v182
    %216 = vmatpush.msra.mxu0 %v181
    %217 = vmatmul.f32.gmra.mxu0 %v180
    %v218 = vpop.f32.mrf.mxu0
    %v219 = vadd.f32 %v199, %v218
    %220 = vdwg.mxu0
    %vm221 = vcmask 64512
    %222 = vst.msk [vmem:[#allocation7] sm:$0xff] %vm221, %v219
    // Predicated region
    $region46: #{tpu_custom_call.1} parent=1 // pred_check
      _
    $region47: #{tpu_custom_call.1} parent=1 // pred_check_branch
      %224 = sbr.rel (0) target = $region49
    $region48: #{tpu_custom_call.1} parent=1 // pred_region
      %226 = vsyncadd [#allocation4], 0
      %s228 = sshll.u32 [#allocation7], 4
      %s229 = int_to_ptr.vmem [resolvable:$true] %s228
      %s230 = sshll.u32 %s9, 4
      %s231 = int_to_ptr.hbm [resolvable:$true] %s230
      %233 = dma.vmem_to_hbm [thread:$0]  %s229, 128, %s231, [#allocation4]
    $region49: #{tpu_custom_call.1} parent=1 // pred_fallthru
      _
    // Predicated region
    $region50: #{tpu_custom_call.1} parent=1 // pred_check
      _
    $region51: #{tpu_custom_call.1} parent=1 // pred_check_branch
      %235 = sbr.rel (0) target = $region53
    $region52: #{tpu_custom_call.1} parent=1 // pred_region
      %237 = dma.done [#allocation4], 128
    $region53: #{tpu_custom_call.1} parent=1 // pred_fallthru
      _
    %238 = vsyncpa [#allocation3], 1
    %239 = vsyncpa [#allocation6], 1
    %240 = vsyncpa [#allocation4], 1

</llo_original>
